<compile_context>
chip_gen: v7x
topology: tpu7x:2x2x1
jax: 0.10.0
libtpu: 0.0.40
codegen_flags: <defaults>
</compile_context>

<pallas_src>
import functools

import jax
import jax.numpy as jnp
from jax.experimental import pallas as pl
from jax.experimental.pallas import tpu as pltpu


def _round_up(x, m):
    return (x + m - 1) // m * m


def _padded_vmem_bytes(rows, cols, itemsize):
    """Conservative (8, 128)-tile padded footprint of one 2-D VMEM buffer."""
    return _round_up(rows, 8) * _round_up(cols, 128) * itemsize


def _vmem_capacity_bytes():
    try:
        return int(pltpu.get_tpu_info().vmem_capacity_bytes)
    except Exception:
        return 64 << 20  # conservative fallback (v7x per-TensorCore VMEM)


def _lily_kernel(tok_ref, wr_ref, ad_ref, out_ref, probs_ref):
    """One (token-tile i, output-chunk j) grid cell.

    tok_ref  : (tm, in_dim)  token tile       (block index constant in j -> resident)
    wr_ref   : (E, in_dim)   router weight    (fully resident)
    ad_ref   : (E, tn)       adapters chunk, flattened over (in_dim*out_dim)
    out_ref  : (tm, tn)      combined-adapter output tile
    probs_ref: (tm, E) f32   VMEM scratch caching softmax(router(tokens))
    """
    # Router matmul + softmax only on the first output chunk of each token
    # tile; reused for every subsequent chunk j.
    @pl.when(pl.program_id(1) == 0)
    def _():
        # (tm, in_dim) x (E, in_dim) contracted over in_dim -> (tm, E) on MXU.
        logits = jax.lax.dot_general(
            tok_ref[...], wr_ref[...],
            dimension_numbers=(((1,), (1,)), ((), ())),
            preferred_element_type=jnp.float32)
        m = jnp.max(logits, axis=-1, keepdims=True)
        e = jnp.exp(logits - m)
        probs_ref[...] = e / jnp.sum(e, axis=-1, keepdims=True)

    # Mixture of adapters: (tm, E) @ (E, tn) on the MXU, f32 accumulation.
    mixed = jnp.dot(probs_ref[...].astype(ad_ref.dtype), ad_ref[...],
                    preferred_element_type=jnp.float32)
    out_ref[...] = mixed.astype(out_ref.dtype)


@functools.partial(jax.jit, static_argnames=("tm", "tn", "out_dtype"))
def lily_hp_forward(tokens, router_w, adapters, *, tm=256, tn=2048,
                    out_dtype=None):
    """tokens: (B, L, in_dim); router_w: (E, in_dim); adapters: (E, in_dim, out_dim).

    Returns the combined adapter of shape (B, L, in_dim, out_dim).
    """
    B, L, in_dim = tokens.shape
    E, in_dim2, out_dim = adapters.shape
    assert router_w.shape == (E, in_dim), router_w.shape
    assert in_dim2 == in_dim, (in_dim2, in_dim)
    assert tn % 128 == 0, "tn must be a multiple of 128 (lane-dense output)"

    M = B * L
    N = in_dim * out_dim
    N128 = _round_up(N, 128)
    if out_dtype is None:
        out_dtype = tokens.dtype

    tok_b = jnp.dtype(tokens.dtype).itemsize
    w_b = jnp.dtype(router_w.dtype).itemsize
    ad_b = jnp.dtype(adapters.dtype).itemsize
    out_b = jnp.dtype(out_dtype).itemsize

    # Tile selection: big token tiles, lane-dense output chunks; shrink until
    # the double-buffered working set fits this generation's VMEM.
    tm_eff = min(_round_up(tm, 8), _round_up(M, 8))
    tn_eff = min(tn, N128)

    cap = _vmem_capacity_bytes()
    budget = max(cap - (12 << 20), 24 << 20)

    def _need(tm_, tn_):
        return (2 * _padded_vmem_bytes(tm_, in_dim, tok_b)      # tokens tile
                + 2 * _padded_vmem_bytes(E, in_dim, w_b)        # router weight
                + 2 * _padded_vmem_bytes(E, tn_, ad_b)          # adapters chunk
                + 2 * _padded_vmem_bytes(tm_, tn_, out_b)       # output tile
                + _padded_vmem_bytes(tm_, E, 4))                # probs scratch

    while _need(tm_eff, tn_eff) > budget and tn_eff > 512:
        tn_eff = _round_up(tn_eff // 2, 128)
    while _need(tm_eff, tn_eff) > budget and tm_eff > 64:
        tm_eff = _round_up(tm_eff // 2, 8)

    vmem_limit = int(min(max(_need(tm_eff, tn_eff) + (4 << 20), 32 << 20),
                         cap - (8 << 20)))

    n_i = pl.cdiv(M, tm_eff)      # token axis  (OUTER, parallel)
    n_j = pl.cdiv(N128, tn_eff)   # output axis (INNER, arbitrary -> probs cache)

    tok2d = tokens.reshape(M, in_dim)                 # no padding copy
    ad_flat = adapters.reshape(E, N)
    if N128 != N:                                     # rare: N not lane-aligned
        ad_flat = jnp.pad(ad_flat, ((0, 0), (0, N128 - N)))

    cost = pl.CostEstimate(
        flops=2 * M * in_dim * E + 2 * M * E * N128,
        transcendentals=M * E,
        bytes_accessed=(M * in_dim * tok_b            # tokens read once
                        + E * in_dim * w_b            # router weight read once
                        + n_i * E * N128 * ad_b       # adapters per token tile
                        + M * N128 * out_b),          # output write
    )

    out2d = pl.pallas_call(
        _lily_kernel,
        out_shape=jax.ShapeDtypeStruct((M, N128), out_dtype),
        grid_spec=pltpu.PrefetchScalarGridSpec(
            num_scalar_prefetch=0,
            grid=(n_i, n_j),
            in_specs=[
                pl.BlockSpec((tm_eff, in_dim), lambda i, j: (i, 0)),   # tokens
                pl.BlockSpec((E, in_dim), lambda i, j: (0, 0)),        # router W
                pl.BlockSpec((E, tn_eff), lambda i, j: (0, j)),        # adapters
            ],
            out_specs=pl.BlockSpec((tm_eff, tn_eff), lambda i, j: (i, j)),
            scratch_shapes=[pltpu.VMEM((tm_eff, E), jnp.float32)],     # probs
        ),
        compiler_params=pltpu.CompilerParams(
            dimension_semantics=("parallel", "arbitrary"),
            vmem_limit_bytes=vmem_limit,
        ),
        cost_estimate=cost,
    )(tok2d, router_w, ad_flat)

    if N128 != N:
        out2d = out2d[:, :N]
    return out2d.reshape(B, L, in_dim, out_dim)


def _reference(tokens, router_w, adapters):
    logits = jnp.einsum("bli,ei->ble", tokens, router_w)
    probs = jax.nn.softmax(logits, axis=-1)
    return jnp.einsum("ble,eio->blio", probs, adapters)


if __name__ == "__main__":
    # Small shapes consistent with the module's forward.
    B, L, in_dim, num_experts, out_dim = 2, 8, 32, 4, 4

    key = jax.random.PRNGKey(0)
    k_tok, k_router, k_adapt = jax.random.split(key, 3)

    tokens = jax.random.normal(k_tok, (B, L, in_dim), dtype=jnp.float32)
    # nn.Linear(in_dim, E, bias=False) weight has shape (E, in_dim).
    router_w = jax.random.normal(k_router, (num_experts, in_dim),
                                 dtype=jnp.float32) * 0.1
    # Module initializes adapters to zeros; use small random values here so the
    # numerical check is non-trivial (shape matches nn.Parameter(E, in_dim, out_dim)).
    adapters = jax.random.normal(k_adapt, (num_experts, in_dim, out_dim),
                                 dtype=jnp.float32) * 0.1

    out = jax.block_until_ready(lily_hp_forward(tokens, router_w, adapters))

    ref = _reference(tokens, router_w, adapters)
    assert out.shape == (B, L, in_dim, out_dim), out.shape
    # Tolerance covers default MXU matmul precision for f32 inputs.
    assert jnp.allclose(out, ref, atol=2e-3, rtol=2e-3), "mismatch vs reference"

    print("KERNEL_OK")
</pallas_src>

<mosaic_0001>
module attributes {stable_mosaic.version = 11 : i64} {
  func.func @_lily_kernel(%arg0: i32, %arg1: i32, %arg2: memref<16x32xf32, #tpu.memory_space<vmem>>, %arg3: memref<4x32xf32, #tpu.memory_space<vmem>>, %arg4: memref<4x128xf32, #tpu.memory_space<vmem>>, %arg5: memref<16x128xf32, #tpu.memory_space<vmem>>, %arg6: memref<16x4xf32, #tpu.memory_space<vmem>>) attributes {dimension_semantics = [#tpu.dimension_semantics<parallel>, #tpu.dimension_semantics<arbitrary>], iteration_bounds = array<i64: 1, 1>, scalar_prefetch = 0 : i64, scratch_operands = 1 : i64, tpu.core_type = #tpu.core_type<tc>, window_params = [{transform_indices = @transform_0, window_bounds = array<i64: 16, 32>}, {pipeline_mode = #tpu.pipeline_mode<synchronous>, transform_indices = @transform_1, window_bounds = array<i64: 4, 32>}, {transform_indices = @transform_2, window_bounds = array<i64: 4, 128>}, {transform_indices = @transform_3, window_bounds = array<i64: 16, 128>}]} {
    %c0_i32 = arith.constant 0 : i32
    %0 = arith.cmpi eq, %arg1, %c0_i32 : i32
    %1 = arith.extui %0 : i1 to i32
    %c0_i32_0 = arith.constant 0 : i32
    %2 = arith.cmpi ne, %1, %c0_i32_0 : i32
    scf.if %2 {
      %c0_6 = arith.constant 0 : index
      %c0_7 = arith.constant 0 : index
      %7 = vector.load %arg2[%c0_6, %c0_7] : memref<16x32xf32, #tpu.memory_space<vmem>>, vector<16x32xf32>
      %c0_8 = arith.constant 0 : index
      %c0_9 = arith.constant 0 : index
      %8 = vector.load %arg3[%c0_8, %c0_9] : memref<4x32xf32, #tpu.memory_space<vmem>>, vector<4x32xf32>
      %cst_10 = arith.constant dense<0.000000e+00> : vector<16x4xf32>
      %9 = tpu.matmul %7, %8, %cst_10 {dimension_numbers = #tpu.dot_dimension_numbers<[1], [1], [0], [0], [0, 0, 1, 0], [], []>} : vector<16x32xf32>, vector<4x32xf32>, vector<16x4xf32> -> vector<16x4xf32>
      %cst_11 = arith.constant dense<0xFF800000> : vector<16xf32>
      %10 = vector.multi_reduction <maximumf>, %9, %cst_11 [1] : vector<16x4xf32> to vector<16xf32>
      %11 = vector.shape_cast %10 : vector<16xf32> to vector<16x1xf32>
      %12 = vector.broadcast %11 : vector<16x1xf32> to vector<16x4xf32>
      %13 = arith.subf %9, %12 : vector<16x4xf32>
      %14 = math.exp %13 : vector<16x4xf32>
      %cst_12 = arith.constant dense<0.000000e+00> : vector<16xf32>
      %15 = vector.multi_reduction <add>, %14, %cst_12 [1] : vector<16x4xf32> to vector<16xf32>
      %16 = vector.shape_cast %15 : vector<16xf32> to vector<16x1xf32>
      %17 = vector.broadcast %16 : vector<16x1xf32> to vector<16x4xf32>
      %18 = arith.divf %14, %17 : vector<16x4xf32>
      %c0_13 = arith.constant 0 : index
      %c0_14 = arith.constant 0 : index
      %19 = vector.load %arg6[%c0_13, %c0_14] : memref<16x4xf32, #tpu.memory_space<vmem>>, vector<16x4xf32>
      tpu.vector_store %arg6[%c0_13, %c0_14], %18 {strides = array<i32>} : memref<16x4xf32, #tpu.memory_space<vmem>>, vector<16x4xf32>,
    } else {
    }
    %c0 = arith.constant 0 : index
    %c0_1 = arith.constant 0 : index
    %3 = vector.load %arg6[%c0, %c0_1] : memref<16x4xf32, #tpu.memory_space<vmem>>, vector<16x4xf32>
    %c0_2 = arith.constant 0 : index
    %c0_3 = arith.constant 0 : index
    %4 = vector.load %arg4[%c0_2, %c0_3] : memref<4x128xf32, #tpu.memory_space<vmem>>, vector<4x128xf32>
    %cst = arith.constant dense<0.000000e+00> : vector<16x128xf32>
    %5 = tpu.matmul %3, %4, %cst {dimension_numbers = #tpu.dot_dimension_numbers<[1], [0], [0], [1], [0, 0, 1, 1], [], []>} : vector<16x4xf32>, vector<4x128xf32>, vector<16x128xf32> -> vector<16x128xf32>
    %c0_4 = arith.constant 0 : index
    %c0_5 = arith.constant 0 : index
    %6 = vector.load %arg5[%c0_4, %c0_5] : memref<16x128xf32, #tpu.memory_space<vmem>>, vector<16x128xf32>
    tpu.vector_store %arg5[%c0_4, %c0_5], %5 {strides = array<i32>} : memref<16x128xf32, #tpu.memory_space<vmem>>, vector<16x128xf32>,
    return
  }
  func.func @transform_0(%arg0: i32, %arg1: i32) -> (i32, i32) {
    %c0_i32 = arith.constant 0 : i32
    %c0_i32_0 = arith.constant 0 : i32
    return %arg0, %c0_i32 : i32, i32
  }
  func.func @transform_1(%arg0: i32, %arg1: i32) -> (i32, i32) {
    %c0_i32 = arith.constant 0 : i32
    %c0_i32_0 = arith.constant 0 : i32
    %c0_i32_1 = arith.constant 0 : i32
    return %c0_i32, %c0_i32_0 : i32, i32
  }
  func.func @transform_2(%arg0: i32, %arg1: i32) -> (i32, i32) {
    %c0_i32 = arith.constant 0 : i32
    %c0_i32_0 = arith.constant 0 : i32
    return %c0_i32, %arg1 : i32, i32
  }
  func.func @transform_3(%arg0: i32, %arg1: i32) -> (i32, i32) {
    %c0_i32 = arith.constant 0 : i32
    return %arg0, %arg1 : i32, i32
  }
}

</mosaic_0001>

<llo_original>
// kernel: lily_hp_forward.1
$region0: #{lily_hp_forward.1}
  #allocation0 [shape = 'u32[]', space=smem, size = 0x4, offset = 0x4, fixed_abs, tag = 'smem constant byte address 0x4 - core index']
  #allocation1 [shape = 'u32[144,128]{1,0:T(1,128)}', space=vmem, size = 0x12000, scoped, tag = 'internal scratch']
  #allocation2 [shape = 'f32[16,4]{1,0:T(8,128)}', space=vmem, size = 0x2000, scoped, tag = 'scratch operand']
  %s0 = inlined_call_operand.vmem [shape: f32[16,32], index: 0, kind: input, shape index: {}]
  %s1 = inlined_call_operand.vmem [shape: f32[4,32], index: 1, kind: input, shape index: {}]
  %s2 = inlined_call_operand.vmem [shape: f32[4,128], index: 2, kind: input, shape index: {}]
  %s3 = inlined_call_operand.vmem [shape: f32[16,128], index: 3, kind: output, shape index: {}]
  %s4 = sld [smem:[#allocation0]]
  $region26: #{lily_hp_forward.1} parent=0
    _
  %s6 = ssub.s32 1, %s4
  %s7 = scalar_select 0, %s6, %s4
  // Predicated region
  $region2: #{lily_hp_forward.1} parent=0 // pred_check
    _
  $region3: #{lily_hp_forward.1} parent=0 // pred_check_branch
    %9 = sbr.rel (0) target = $region5
  $region4: #{lily_hp_forward.1} parent=0 // pred_region
    _
  $region5: #{lily_hp_forward.1} parent=0 // pred_fallthru
    _
  // Predicated region
  $region6: #{lily_hp_forward.1} parent=0 // pred_check
    _
  $region7: #{lily_hp_forward.1} parent=0 // pred_check_branch
    %11 = sbr.rel (0) target = $region9
  $region8: #{lily_hp_forward.1} parent=0 // pred_region
    _
  $region9: #{lily_hp_forward.1} parent=0 // pred_fallthru
    _
  // Predicated region
  $region10: #{lily_hp_forward.1} parent=0 // pred_check
    _
  $region11: #{lily_hp_forward.1} parent=0 // pred_check_branch
    %13 = sbr.rel (0) target = $region13
  $region12: #{lily_hp_forward.1} parent=0 // pred_region
    _
  $region13: #{lily_hp_forward.1} parent=0 // pred_fallthru
    _
  %p14 = scmp.eq.s32.totalorder 0, 0
  // Predicated region
  $region14: #{lily_hp_forward.1} parent=0 // pred_check
    %p15 = pneg %p14
  $region15: #{lily_hp_forward.1} parent=0 // pred_check_branch
    %17 = sbr.rel (%p15) target = $region17
  $region16: #{lily_hp_forward.1} parent=0 // pred_region
    %v18 = vld [vmem:[%s0] sm:$0xff]
    %v19 = vld [vmem:[%s0 + $0x8] sm:$0xff]
    %v20 = vld [vmem:[%s1] sm:$0xf]
    %vm21 = vcmask 261120
    %v23 = vsel %vm21, %v18, 0
    %v26 = vsel %vm21, %v19, 0
    %v29 = vsel %vm21, %v20, 0
    %31 = vmatprep.subr.mxu0 0.0
    %32 = vmatpush1.xpose.msra.mxu0 %v29
    %33 = vmatprep.subr.mxu0 0.0
    %34 = vmatpush1.xpose.msra.mxu0 0.0
    %35 = vmatprep.subr.mxu0 0.0
    %36 = vmatpush1.xpose.msra.mxu0 0.0
    %37 = vmatprep.subr.mxu0 0.0
    %38 = vmatpush1.xpose.msra.mxu0 0.0
    %39 = vmatprep.subr.mxu0 0.0
    %40 = vmatpush1.xpose.msra.mxu0 0.0
    %41 = vmatprep.subr.mxu0 0.0
    %42 = vmatpush1.xpose.msra.mxu0 0.0
    %43 = vmatprep.subr.mxu0 0.0
    %44 = vmatpush1.xpose.msra.mxu0 0.0
    %45 = vmatprep.subr.mxu0 0.0
    %46 = vmatpush1.xpose.msra.mxu0 0.0
    %47 = vmatprep.subr.mxu0 0.0
    %48 = vmatpush1.xpose.msra.mxu0 0.0
    %49 = vmatprep.subr.mxu0 0.0
    %50 = vmatpush1.xpose.msra.mxu0 0.0
    %51 = vmatprep.subr.mxu0 0.0
    %52 = vmatpush1.xpose.msra.mxu0 0.0
    %53 = vmatprep.subr.mxu0 0.0
    %54 = vmatpush1.xpose.msra.mxu0 0.0
    %55 = vmatprep.subr.mxu0 0.0
    %56 = vmatpush1.xpose.msra.mxu0 0.0
    %57 = vmatprep.subr.mxu0 0.0
    %58 = vmatpush1.xpose.msra.mxu0 0.0
    %59 = vmatprep.subr.mxu0 0.0
    %60 = vmatpush1.xpose.msra.mxu0 0.0
    %61 = vmatprep.subr.mxu0 0.0
    %62 = vmatpush1.xpose.msra.mxu0 0.0
    %63 = vmatprep.subr.mxu0 0.0
    %64 = vmatpush1.xpose.msra.mxu0 0.0
    %65 = vmatprep.subr.mxu0 0.0
    %66 = vmatpush1.xpose.msra.mxu0 0.0
    %67 = vmatprep.subr.mxu0 0.0
    %68 = vmatpush1.xpose.msra.mxu0 0.0
    %69 = vmatprep.subr.mxu0 0.0
    %70 = vmatpush1.xpose.msra.mxu0 0.0
    %71 = vmatprep.subr.mxu0 0.0
    %72 = vmatpush1.xpose.msra.mxu0 0.0
    %73 = vmatprep.subr.mxu0 0.0
    %74 = vmatpush1.xpose.msra.mxu0 0.0
    %75 = vmatprep.subr.mxu0 0.0
    %76 = vmatpush1.xpose.msra.mxu0 0.0
    %77 = vmatprep.subr.mxu0 0.0
    %78 = vmatpush1.xpose.msra.mxu0 0.0
    %79 = vmatprep.subr.mxu0 0.0
    %80 = vmatpush1.xpose.msra.mxu0 0.0
    %81 = vmatprep.subr.mxu0 0.0
    %82 = vmatpush1.xpose.msra.mxu0 0.0
    %83 = vmatprep.subr.mxu0 0.0
    %84 = vmatpush1.xpose.msra.mxu0 0.0
    %85 = vmatprep.subr.mxu0 0.0
    %86 = vmatpush1.xpose.msra.mxu0 0.0
    %87 = vmatprep.subr.mxu0 0.0
    %88 = vmatpush1.xpose.msra.mxu0 0.0
    %89 = vmatprep.subr.mxu0 0.0
    %90 = vmatpush1.xpose.msra.mxu0 0.0
    %91 = vmatprep.subr.mxu0 0.0
    %92 = vmatpush1.xpose.msra.mxu0 0.0
    %93 = vmatprep.subr.mxu0 0.0
    %94 = vmatpush1.xpose.msra.mxu0 0.0
    %95 = vmatprep.mubr.f32.mxu0 0.0
    %96 = vmatmul.mubr.f32.gmra.mrb[0].mxu0 %v23
    %v97 = vpop.f32.mrb[0].mxu0
    %v98 = vadd.f32 0.0, %v97
    %v99 = vpop.f32.mrb[0].mxu0
    %100 = vmatprep.mubr.f32.mxu0 0.0
    %101 = vmatmul.mubr.f32.gmra.mrb[0].mxu0 %v26
    %v102 = vpop.f32.mrb[0].mxu0
    %v103 = vadd.f32 0.0, %v102
    %v104 = vpop.f32.mrb[0].mxu0
    %105 = vdwg.mxu0
    %vm106 = vcmask 31744
    %v107 = vsel %vm106, %v98, -inf
    %108 = vmax.xlane.f32.xlu0 %v107
    %v109 = vpop.xlane.xlu0 %108
    %v110 = vsel %vm106, %v103, -inf
    %111 = vmax.xlane.f32.xlu0 %v110
    %v112 = vpop.xlane.xlu0 %111
    %v113 = vsub.f32 %v98, %v109
    %v114 = vsub.f32 %v103, %v112
    %v115 = vmul.f32 %v113, 1.442695
    %v116 = vpow.pop %v115
    %v117 = vmul.f32 %v114, 1.442695
    %v118 = vpow.pop %v117
    %v119 = vsel %vm106, %v116, 0.0
    %120 = vadd.xlane.f32.xlu0 %v119
    %v121 = vpop.xlane.xlu0 %120
    %v122 = vsel %vm106, %v118, 0.0
    %123 = vadd.xlane.f32.xlu0 %v122
    %v124 = vpop.xlane.xlu0 %123
    %v125 = vrcp.pop %v121
    %v126 = vmul.f32 %v116, %v125
    %v127 = vrcp.pop %v124
    %v128 = vmul.f32 %v118, %v127
    %129 = vst.msk [vmem:[#allocation2] sm:$0xff] %vm106, %v126
    %130 = vst.msk [vmem:[#allocation2 + $0x8] sm:$0xff] %vm106, %v128
  $region17: #{lily_hp_forward.1} parent=0 // pred_fallthru
    _
  %v131 = vld [vmem:[#allocation2] sm:$0xff]
  %v132 = vld [vmem:[#allocation2 + $0x8] sm:$0xff]
  %v133 = vld [vmem:[%s2] sm:$0xf]
  %vm134 = vcmask 31744
  %v136 = vsel %vm134, %v131, 0
  %v139 = vsel %vm134, %v132, 0
  %vm141 = vcmask 1043456
  %v143 = vsel %vm141, %v133, 0
  %145 = vmatprep.subr.mxu0 0.0
  %146 = vmatpush1.msra.mxu0 %v143
  %147 = vmatprep.subr.mxu0 0.0
  %148 = vmatpush1.msra.mxu0 0.0
  %149 = vmatprep.subr.mxu0 0.0
  %150 = vmatpush1.msra.mxu0 0.0
  %151 = vmatprep.subr.mxu0 0.0
  %152 = vmatpush1.msra.mxu0 0.0
  %153 = vmatprep.subr.mxu0 0.0
  %154 = vmatpush1.msra.mxu0 0.0
  %155 = vmatprep.subr.mxu0 0.0
  %156 = vmatpush1.msra.mxu0 0.0
  %157 = vmatprep.subr.mxu0 0.0
  %158 = vmatpush1.msra.mxu0 0.0
  %159 = vmatprep.subr.mxu0 0.0
  %160 = vmatpush1.msra.mxu0 0.0
  %161 = vmatprep.subr.mxu0 0.0
  %162 = vmatpush1.msra.mxu0 0.0
  %163 = vmatprep.subr.mxu0 0.0
  %164 = vmatpush1.msra.mxu0 0.0
  %165 = vmatprep.subr.mxu0 0.0
  %166 = vmatpush1.msra.mxu0 0.0
  %167 = vmatprep.subr.mxu0 0.0
  %168 = vmatpush1.msra.mxu0 0.0
  %169 = vmatprep.subr.mxu0 0.0
  %170 = vmatpush1.msra.mxu0 0.0
  %171 = vmatprep.subr.mxu0 0.0
  %172 = vmatpush1.msra.mxu0 0.0
  %173 = vmatprep.subr.mxu0 0.0
  %174 = vmatpush1.msra.mxu0 0.0
  %175 = vmatprep.subr.mxu0 0.0
  %176 = vmatpush1.msra.mxu0 0.0
  %177 = vmatprep.subr.mxu0 0.0
  %178 = vmatpush1.msra.mxu0 0.0
  %179 = vmatprep.subr.mxu0 0.0
  %180 = vmatpush1.msra.mxu0 0.0
  %181 = vmatprep.subr.mxu0 0.0
  %182 = vmatpush1.msra.mxu0 0.0
  %183 = vmatprep.subr.mxu0 0.0
  %184 = vmatpush1.msra.mxu0 0.0
  %185 = vmatprep.subr.mxu0 0.0
  %186 = vmatpush1.msra.mxu0 0.0
  %187 = vmatprep.subr.mxu0 0.0
  %188 = vmatpush1.msra.mxu0 0.0
  %189 = vmatprep.subr.mxu0 0.0
  %190 = vmatpush1.msra.mxu0 0.0
  %191 = vmatprep.subr.mxu0 0.0
  %192 = vmatpush1.msra.mxu0 0.0
  %193 = vmatprep.subr.mxu0 0.0
  %194 = vmatpush1.msra.mxu0 0.0
  %195 = vmatprep.subr.mxu0 0.0
  %196 = vmatpush1.msra.mxu0 0.0
  %197 = vmatprep.subr.mxu0 0.0
  %198 = vmatpush1.msra.mxu0 0.0
  %199 = vmatprep.subr.mxu0 0.0
  %200 = vmatpush1.msra.mxu0 0.0
  %201 = vmatprep.subr.mxu0 0.0
  %202 = vmatpush1.msra.mxu0 0.0
  %203 = vmatprep.subr.mxu0 0.0
  %204 = vmatpush1.msra.mxu0 0.0
  %205 = vmatprep.subr.mxu0 0.0
  %206 = vmatpush1.msra.mxu0 0.0
  %207 = vmatprep.subr.mxu0 0.0
  %208 = vmatpush1.msra.mxu0 0.0
  %209 = vmatprep.mubr.f32.mxu0 0.0
  %210 = vmatmul.mubr.f32.gmra.mrb[0].mxu0 %v136
  %v211 = vpop.f32.mrb[0].mxu0
  %v212 = vadd.f32 0.0, %v211
  %v213 = vpop.f32.mrb[0].mxu0
  %214 = vmatprep.mubr.f32.mxu0 0.0
  %215 = vmatmul.mubr.f32.gmra.mrb[0].mxu0 %v139
  %v216 = vpop.f32.mrb[0].mxu0
  %v217 = vadd.f32 0.0, %v216
  %v218 = vpop.f32.mrb[0].mxu0
  %219 = vdwg.mxu0
  %220 = vst [vmem:[%s3] sm:$0xff] %v212
  %221 = vst [vmem:[%s3 + $0x8] sm:$0xff] %v217
  // Predicated region
  $region18: #{lily_hp_forward.1} parent=0 // pred_check
    _
  $region19: #{lily_hp_forward.1} parent=0 // pred_check_branch
    %223 = sbr.rel (0) target = $region21
  $region20: #{lily_hp_forward.1} parent=0 // pred_region
    _
  $region21: #{lily_hp_forward.1} parent=0 // pred_fallthru
    _
  // Predicated region
  $region22: #{lily_hp_forward.1} parent=0 // pred_check
    _
  $region23: #{lily_hp_forward.1} parent=0 // pred_check_branch
    %225 = sbr.rel (0) target = $region25
  $region24: #{lily_hp_forward.1} parent=0 // pred_region
    _
  $region25: #{lily_hp_forward.1} parent=0 // pred_fallthru
    _

</llo_original>
